<compile_context>
chip_gen: v5e
topology: v5e:2x2
jax: 0.10.0
libtpu: 0.0.40
codegen_flags: <defaults>
</compile_context>

<pallas_src>
import jax
import jax.numpy as jnp
from jax.experimental import pallas as pl
from jax.experimental.pallas import tpu as pltpu


_SOFTPLUS_THRESHOLD = 20.0          # PyTorch softplus linear-branch threshold
_TARGET_BLOCK_BYTES = 4 * 1024 * 1024   # 4 MiB blocks (in+out, double-buffered -> 16 MiB)
_SMALL_BYTES = 512 * 1024               # below this a single block is fine
_MIN_STEPS = 2                          # keep >=2 grid steps for overlap / v7x 2 TCs
_VMEM_LIMIT_BYTES = 40 << 20            # explicit scoped-VMEM limit (safe on all gens)


def _mish_math(x_f32):
    """mish(x) = x * tanh(softplus(x)) with a single exp per element.

    tanh(ln(1+e)) == ((1+e)^2 - 1) / ((1+e)^2 + 1) == e*(2+e) / (e*(2+e) + 2).
    The e*(2+e) form avoids catastrophic cancellation for x << 0.
    For x > 20 (PyTorch softplus threshold) softplus(x) -> x and tanh(x) == 1
    in f32, so mish(x) == x.
    """
    e = jnp.exp(jnp.minimum(x_f32, _SOFTPLUS_THRESHOLD))
    num = e * (2.0 + e)
    tsp = num / (num + 2.0)
    return jnp.where(x_f32 > _SOFTPLUS_THRESHOLD, x_f32, x_f32 * tsp)


def _mish_kernel(x_ref, o_ref):
    x = x_ref[...].astype(jnp.float32)
    o_ref[...] = _mish_math(x).astype(o_ref.dtype)


def _pick_lanes(n128: int) -> int:
    """Widest lane count dividing n128 (n128 is a multiple of 128)."""
    for lanes in (1024, 512, 256, 128):
        if n128 % lanes == 0:
            return lanes
    return 128  # unreachable


def _mish_2d(x2d, rows: int, lanes: int, itemsize: int, out_dtype):
    """Run the Pallas kernel over a lane-dense (rows, lanes) view."""
    tile = max(8, 32 // itemsize)  # sublane tile: f32 -> 8, bf16 -> 16, int8 -> 32
    total_bytes = rows * lanes * itemsize

    if total_bytes <= _SMALL_BYTES:
        # Tiny call: one block; per-step overhead dominates regardless.
        br = rows
    else:
        # Itemsize-aware block rows, tile-aligned.
        br = max(tile, (_TARGET_BLOCK_BYTES // (lanes * itemsize)) // tile * tile)
        if rows <= br:
            # Shrink so the grid has >= _MIN_STEPS steps: enables DMA/compute
            # overlap and lets both v7x TensorCores take row-blocks.
            per_step = (rows + _MIN_STEPS - 1) // _MIN_STEPS
            br = max(tile, ((per_step + tile - 1) // tile) * tile)

    grid = (pl.cdiv(rows, br),)  # ragged last block masked by Pallas

    return pl.pallas_call(
        _mish_kernel,
        out_shape=jax.ShapeDtypeStruct((rows, lanes), out_dtype),
        grid_spec=pltpu.PrefetchScalarGridSpec(
            num_scalar_prefetch=0,
            grid=grid,
            in_specs=[pl.BlockSpec((br, lanes), lambda i: (i, 0))],
            out_specs=pl.BlockSpec((br, lanes), lambda i: (i, 0)),
        ),
        compiler_params=pltpu.CompilerParams(
            dimension_semantics=("parallel",),   # shard row-blocks across TCs
            vmem_limit_bytes=_VMEM_LIMIT_BYTES,
        ),
    )(x2d)


def mish(x: jax.Array) -> jax.Array:
    """Applies mish(x) = x * tanh(softplus(x)) element-wise. Any shape/dtype."""
    orig_shape = x.shape
    orig_dtype = x.dtype
    n = x.size
    if n == 0:
        return x

    flat = x.reshape(-1)                 # layout-only, no HBM traffic
    itemsize = x.dtype.itemsize

    n_prefix = (n // 128) * 128          # kernel covers the 128-aligned prefix
    n_tail = n - n_prefix

    if n_prefix == 0:
        # Fewer than 128 elements: plain jnp (a kernel launch isn't worth it).
        return _mish_math(flat.astype(jnp.float32)).astype(orig_dtype).reshape(orig_shape)

    lanes = _pick_lanes(n_prefix)
    rows = n_prefix // lanes
    prefix2d = flat[:n_prefix].reshape(rows, lanes)
    out_prefix = _mish_2d(prefix2d, rows, lanes, itemsize, orig_dtype).reshape(-1)

    if n_tail == 0:
        return out_prefix.reshape(orig_shape)

    # <128-element ragged tail in plain jnp: avoids the whole-tensor
    # pad + post-slice (~3x HBM traffic) of the previous version.
    tail = _mish_math(flat[n_prefix:].astype(jnp.float32)).astype(orig_dtype)
    return jnp.concatenate([out_prefix, tail]).reshape(orig_shape)


def _reference_mish(x):
    # PyTorch-equivalent softplus (threshold=20) + tanh, in plain JAX.
    xf = x.astype(jnp.float32)
    sp = jnp.where(xf > _SOFTPLUS_THRESHOLD, xf,
                   jnp.log1p(jnp.exp(jnp.minimum(xf, _SOFTPLUS_THRESHOLD))))
    return (xf * jnp.tanh(sp)).astype(x.dtype)


if __name__ == "__main__":
    key = jax.random.PRNGKey(0)

    # Main test: module-consistent small shape (N, C, H, W).
    x = jax.random.normal(key, (2, 4, 16, 16), dtype=jnp.float32)
    y = mish(x)
    jax.block_until_ready(y)
    assert y.shape == x.shape and y.dtype == x.dtype
    assert jnp.allclose(y, _reference_mish(x), atol=1e-5, rtol=1e-5)

    # Ragged size (exercises prefix + jnp tail path): 5*77 = 385 elements.
    k1, k2 = jax.random.split(key)
    x_ragged = 10.0 * jax.random.normal(k1, (5, 77), dtype=jnp.float32)
    y_ragged = mish(x_ragged)
    jax.block_until_ready(y_ragged)
    assert jnp.allclose(y_ragged, _reference_mish(x_ragged), atol=1e-5, rtol=1e-5)

    # Sub-128-element case (pure jnp path).
    x_tiny = jax.random.normal(k2, (3, 7, 5), dtype=jnp.float32)
    y_tiny = mish(x_tiny)
    jax.block_until_ready(y_tiny)
    assert jnp.allclose(y_tiny, _reference_mish(x_tiny), atol=1e-5, rtol=1e-5)

    print("KERNEL_OK")
</pallas_src>

<mosaic_0001>
module attributes {stable_mosaic.version = 11 : i64} {
  func.func @_mish_kernel(%arg0: i32, %arg1: memref<2x1024xf32, #tpu.memory_space<vmem>>, %arg2: memref<2x1024xf32, #tpu.memory_space<vmem>>) attributes {dimension_semantics = [#tpu.dimension_semantics<parallel>], iteration_bounds = array<i64: 1>, scalar_prefetch = 0 : i64, scratch_operands = 0 : i64, tpu.core_type = #tpu.core_type<tc>, window_params = [{transform_indices = @transform_0, window_bounds = array<i64: 2, 1024>}, {transform_indices = @transform_1, window_bounds = array<i64: 2, 1024>}]} {
    %c0 = arith.constant 0 : index
    %c0_0 = arith.constant 0 : index
    %0 = vector.load %arg1[%c0, %c0_0] : memref<2x1024xf32, #tpu.memory_space<vmem>>, vector<2x1024xf32>
    %cst = arith.constant 2.000000e+01 : f32
    %1 = vector.broadcast %cst : f32 to vector<2x1024xf32>
    %2 = arith.minimumf %0, %1 : vector<2x1024xf32>
    %3 = math.exp %2 : vector<2x1024xf32>
    %cst_1 = arith.constant 2.000000e+00 : f32
    %4 = vector.broadcast %cst_1 : f32 to vector<2x1024xf32>
    %5 = arith.addf %4, %3 : vector<2x1024xf32>
    %6 = arith.mulf %3, %5 : vector<2x1024xf32>
    %cst_2 = arith.constant 2.000000e+00 : f32
    %7 = vector.broadcast %cst_2 : f32 to vector<2x1024xf32>
    %8 = arith.addf %6, %7 : vector<2x1024xf32>
    %9 = arith.divf %6, %8 : vector<2x1024xf32>
    %cst_3 = arith.constant 2.000000e+01 : f32
    %10 = vector.broadcast %cst_3 : f32 to vector<2x1024xf32>
    %11 = arith.cmpf ogt, %0, %10 : vector<2x1024xf32>
    %12 = arith.mulf %0, %9 : vector<2x1024xf32>
    %13 = arith.select %11, %0, %12 : vector<2x1024xi1>, vector<2x1024xf32>
    %c0_4 = arith.constant 0 : index
    %c0_5 = arith.constant 0 : index
    %14 = vector.load %arg2[%c0_4, %c0_5] : memref<2x1024xf32, #tpu.memory_space<vmem>>, vector<2x1024xf32>
    tpu.vector_store %arg2[%c0_4, %c0_5], %13 {strides = array<i32>} : memref<2x1024xf32, #tpu.memory_space<vmem>>, vector<2x1024xf32>,
    return
  }
  func.func @transform_0(%arg0: i32) -> (i32, i32) {
    %c0_i32 = arith.constant 0 : i32
    %c0_i32_0 = arith.constant 0 : i32
    return %arg0, %c0_i32 : i32, i32
  }
  func.func @transform_1(%arg0: i32) -> (i32, i32) {
    %c0_i32 = arith.constant 0 : i32
    %c0_i32_0 = arith.constant 0 : i32
    return %arg0, %c0_i32 : i32, i32
  }
}

</mosaic_0001>

<llo_original>
// kernel: tpu_custom_call.1
$region0: #{tpu_custom_call.1}
  #allocation0 [shape = 'u32[]', space=smem, size = 0x4, offset = 0x4, fixed_abs, tag = 'smem constant byte address 0x4 - core index']
  #allocation1 [shape = 'u32[72,128]{1,0:T(1,128)}', space=vmem, size = 0x9000, scoped, tag = 'internal scratch']
  %s0 = inlined_call_operand.hbm [shape: f32[2,1024], index: 0, kind: input, shape index: {}]
  %s1 = inlined_call_operand.hbm [shape: f32[2,1024], index: 1, kind: output, shape index: {}]
  %s2 = sld [smem:[#allocation0]]
  $region18: #{tpu_custom_call.1} parent=0
    _
  %s4 = ssub.s32 1, %s2
  %s5 = scalar_select 0, %s4, %s2
  $region1: #{tpu_custom_call.1} parent=0
    #allocation2 [shape = 'u8[8192]{0}', space=vmem, size = 0x2000, scoped, tag = 'input window, operand 0, single buffered']
    #allocation3 [shape = 's32[1]{0}', space=sflag, size = 0x4, scoped, tag = 'scoped memory for tpu_custom_call.1']
    #allocation4 [shape = 's32[1]{0}', space=sflag, size = 0x4, scoped, tag = 'scoped memory for tpu_custom_call.1']
    #allocation5 [shape = 'u8[8192]{0}', space=vmem, size = 0x2000, scoped, tag = 'output window, operand 0, single buffered']
    %6 = vsyncpa [#allocation3], 0
    %7 = vsyncpa [#allocation4], 0
    // Predicated region
    $region2: #{tpu_custom_call.1} parent=1 // pred_check
      _
    $region3: #{tpu_custom_call.1} parent=1 // pred_check_branch
      %9 = sbr.rel (0) target = $region5
    $region4: #{tpu_custom_call.1} parent=1 // pred_region
      %11 = vsyncadd [#allocation3], 0
      %s13 = sshll.u32 %s0, 4
      %s14 = int_to_ptr.hbm [resolvable:$true] %s13
      %s15 = sshll.u32 [#allocation2], 4
      %s16 = int_to_ptr.vmem [resolvable:$true] %s15
      %18 = dma.hbm_to_vmem [thread:$0]  %s14, 256, %s16, [#allocation3]
    $region5: #{tpu_custom_call.1} parent=1 // pred_fallthru
      _
    // Predicated region
    $region6: #{tpu_custom_call.1} parent=1 // pred_check
      _
    $region7: #{tpu_custom_call.1} parent=1 // pred_check_branch
      %20 = sbr.rel (0) target = $region9
    $region8: #{tpu_custom_call.1} parent=1 // pred_region
      %22 = dma.done [#allocation3], 256
    $region9: #{tpu_custom_call.1} parent=1 // pred_fallthru
      _
    %v23 = vld [vmem:[#allocation2] sm:$0xff]
    %v24 = vld [vmem:[#allocation2 + $0x8] sm:$0xff]
    %v25 = vmin.f32 %v23, 20.0
    %v26 = vmin.f32 %v24, 20.0
    %v27 = vmul.f32 %v25, 1.442695
    %v28 = vpow.pop %v27
    %v29 = vmul.f32 %v26, 1.442695
    %v30 = vpow.pop %v29
    %v31 = vadd.f32 %v28, 2.0
    %v32 = vadd.f32 %v30, 2.0
    %v33 = vmul.f32 %v28, %v31
    %v34 = vmul.f32 %v30, %v32
    %v35 = vadd.f32 %v33, 2.0
    %v36 = vadd.f32 %v34, 2.0
    %v37 = vrcp.pop %v35
    %v38 = vmul.f32 %v35, %v37
    %v39 = vsub.f32 1.0, %v38
    %v40 = vmul.f32 %v37, %v39
    %v41 = vadd.f32 %v37, %v40
    %vm42 = vweird.f32 %v35
    %vm43 = vweird.f32 %v37
    %vm44 = vmor %vm42, %vm43
    %v45 = vsel %vm44, %v37, %v41
    %v46 = vand.u32 2147483647, %v35
    %vm47 = vcmp.eq.f32.partialorder %v46, 8.507059e+37
    %v48 = vand.u32 %v35, 2147483648
    %v49 = vor.u32 1.1754944e-38, %v48
    %v50 = vsel %vm47, %v49, %v45
    %v51 = vmul.f32 %v33, %v50
    %v52 = vrcp.pop %v36
    %v53 = vmul.f32 %v36, %v52
    %v54 = vsub.f32 1.0, %v53
    %v55 = vmul.f32 %v52, %v54
    %v56 = vadd.f32 %v52, %v55
    %vm57 = vweird.f32 %v36
    %vm58 = vweird.f32 %v52
    %vm59 = vmor %vm57, %vm58
    %v60 = vsel %vm59, %v52, %v56
    %v61 = vand.u32 2147483647, %v36
    %vm62 = vcmp.eq.f32.partialorder %v61, 8.507059e+37
    %v63 = vand.u32 %v36, 2147483648
    %v64 = vor.u32 1.1754944e-38, %v63
    %v65 = vsel %vm62, %v64, %v60
    %v66 = vmul.f32 %v34, %v65
    %vm67 = vcmp.gt.f32.partialorder %v23, 20.0
    %vm68 = vcmp.gt.f32.partialorder %v24, 20.0
    %v69 = vmul.f32 %v23, %v51
    %v70 = vmul.f32 %v24, %v66
    %v71 = vsel %vm67, %v23, %v69
    %v72 = vsel %vm68, %v24, %v70
    %73 = vst [vmem:[#allocation5] sm:$0xff] %v71
    %74 = vst [vmem:[#allocation5 + $0x8] sm:$0xff] %v72
    // Predicated region
    $region10: #{tpu_custom_call.1} parent=1 // pred_check
      _
    $region11: #{tpu_custom_call.1} parent=1 // pred_check_branch
      %76 = sbr.rel (0) target = $region13
    $region12: #{tpu_custom_call.1} parent=1 // pred_region
      %78 = vsyncadd [#allocation4], 0
      %s80 = sshll.u32 [#allocation5], 4
      %s81 = int_to_ptr.vmem [resolvable:$true] %s80
      %s82 = sshll.u32 %s1, 4
      %s83 = int_to_ptr.hbm [resolvable:$true] %s82
      %85 = dma.vmem_to_hbm [thread:$0]  %s81, 256, %s83, [#allocation4]
    $region13: #{tpu_custom_call.1} parent=1 // pred_fallthru
      _
    // Predicated region
    $region14: #{tpu_custom_call.1} parent=1 // pred_check
      _
    $region15: #{tpu_custom_call.1} parent=1 // pred_check_branch
      %87 = sbr.rel (0) target = $region17
    $region16: #{tpu_custom_call.1} parent=1 // pred_region
      %89 = dma.done [#allocation4], 256
    $region17: #{tpu_custom_call.1} parent=1 // pred_fallthru
      _
    %90 = vsyncpa [#allocation3], 1
    %91 = vsyncpa [#allocation4], 1

</llo_original>
